<compile_context>
chip_gen: v5e
topology: v5e:2x2
jax: 0.10.0
libtpu: 0.0.40
codegen_flags: <defaults>
</compile_context>

<pallas_src>
import jax
import jax.numpy as jnp
from jax.experimental import pallas as pl
from jax.experimental.pallas import tpu as pltpu

IN_EPS = 1e-5   # InstanceNorm2d default eps
LEAK = 0.2      # LeakyReLU negative slope


# --------------------------- Pallas kernel -----------------------------------

def _make_kernel(spb, m, normalize):
    """Kernel over one block of `spb` samples.

    a_ref: (spb*m, K)    bf16 im2col patches (m = OH*OW, K = 4*4*Cin)
    w_ref: (K, Cout)     bf16 reshaped HWIO weight (resident, loop-invariant)
    o_ref: (spb*m, Cout) out_dtype
    """
    def kernel(a_ref, w_ref, o_ref):
        # One MXU matmul for the whole block, f32 accumulation.
        acc = jnp.dot(a_ref[...], w_ref[...], preferred_element_type=jnp.float32)
        for s in range(spb):                 # static unroll; PER-SAMPLE statistics
            blk = acc[s * m:(s + 1) * m]
            if normalize:
                mean = jnp.mean(blk, axis=0, keepdims=True)            # over spatial
                var = jnp.maximum(
                    jnp.mean(blk * blk, axis=0, keepdims=True) - mean * mean, 0.0)
                blk = (blk - mean) * jax.lax.rsqrt(var + IN_EPS)
            o_ref[s * m:(s + 1) * m, :] = jnp.where(
                blk > 0, blk, LEAK * blk).astype(o_ref.dtype)
    return kernel


# --------------------------- conv glue (tiny im2col) -------------------------

def _im2col_k4s2p1(x):
    """x: (N, H, W, C) -> patches (N, OH, OW, 16*C) for k=4, stride=2, pad=1.

    Kept on the JAX side; allow_input_fusion lets XLA fuse this producer into
    the pallas_call operand instead of round-tripping it through HBM.
    """
    N, H, W, C = x.shape
    xp = jnp.pad(x, ((0, 0), (1, 1), (1, 1), (0, 0)))
    OH = (H + 2 - 4) // 2 + 1
    OW = (W + 2 - 4) // 2 + 1
    cols = []
    for kh in range(4):
        for kw in range(4):
            cols.append(xp[:, kh: kh + 2 * (OH - 1) + 1: 2,
                              kw: kw + 2 * (OW - 1) + 1: 2, :])
    # feature ordering (kh, kw, cin), kh slowest -- matches HWIO weight reshape
    return jnp.concatenate(cols, axis=-1), OH, OW


# --------------------------- parameter prep (hoisted) ------------------------

def prepare_weight(w):
    """w: (4, 4, Cin, Cout) f32 HWIO -> (16*Cin, Cout) bf16. Do ONCE at init."""
    KH, KW, Cin, Cout = w.shape
    assert (KH, KW) == (4, 4)
    return w.reshape(KH * KW * Cin, Cout).astype(jnp.bfloat16)


# --------------------------- forward ----------------------------------------

def msr_block_mid_trans(x, w_mat, *, normalize=True, grid_over_batch=False,
                        out_dtype=jnp.bfloat16):
    """x: (N, H, W, Cin) f32, w_mat: (16*Cin, Cout) bf16 (from prepare_weight)
    -> (N, H//2, W//2, Cout) out_dtype."""
    N, H, W, Cin = x.shape
    K, Cout = w_mat.shape
    assert K == 16 * Cin

    cols, OH, OW = _im2col_k4s2p1(x)
    M = OH * OW
    A = cols.reshape(N * M, K).astype(jnp.bfloat16)   # bf16 MXU operand

    # Batch-fused single invocation by default (best for single-TC v5e/v6e);
    # grid_over_batch=True splits samples across v7x's two TensorCores.
    spb = 1 if (grid_over_batch and N > 1) else N
    grid = (N // spb,)
    kernel = _make_kernel(spb, M, normalize)

    # NOTE: at much larger resolutions (M*K blocks approaching the scoped VMEM
    # limit, first on v7x's 64 MiB) this should switch to an M-tiled grid with
    # a two-pass instance norm (sum/sumsq accumulated over an "arbitrary" M
    # axis, then a normalize pass).  At this size the full block is tens of KiB.
    out = pl.pallas_call(
        kernel,
        out_shape=jax.ShapeDtypeStruct((N * M, Cout), out_dtype),
        grid=grid,
        in_specs=[
            pl.BlockSpec((spb * M, K), lambda i: (i, 0)),   # patches for this block
            pl.BlockSpec((K, Cout), lambda i: (0, 0)),      # full weight, resident
        ],
        out_specs=pl.BlockSpec((spb * M, Cout), lambda i: (i, 0)),
        compiler_params=pltpu.CompilerParams(
            dimension_semantics=("parallel",),
            allow_input_fusion=[True, False],   # fuse im2col producer into operand 0
            vmem_limit_bytes=32 * 1024 * 1024,
        ),
    )(A, w_mat)
    # TODO(synk): Dropout(p>0) training-mode RNG masking not implemented; the
    #             module default p=0.0 is a no-op.
    return out.reshape(N, OH, OW, Cout)


# --------------------------- reference (plain JAX) ---------------------------

def _reference(x, w, normalize=True):
    y = jax.lax.conv_general_dilated(
        x, w, window_strides=(2, 2), padding=((1, 1), (1, 1)),
        dimension_numbers=("NHWC", "HWIO", "NHWC"))
    if normalize:
        mean = jnp.mean(y, axis=(1, 2), keepdims=True)
        var = jnp.mean((y - mean) ** 2, axis=(1, 2), keepdims=True)
        y = (y - mean) * jax.lax.rsqrt(var + IN_EPS)
    return jnp.where(y > 0, y, LEAK * y)


# --------------------------- main --------------------------------------------

if __name__ == "__main__":
    key = jax.random.PRNGKey(0)
    kx, kw = jax.random.split(key)
    # PyTorch input (2, 4, 16, 16) NCHW -> NHWC (2, 16, 16, 4); out_size = 32
    x = jax.random.normal(kx, (2, 16, 16, 4), jnp.float32)
    w = 0.05 * jax.random.normal(kw, (4, 4, 4, 32), jnp.float32)   # HWIO

    # Weight convert hoisted out of the per-call path (parameter-init time).
    w_mat = jax.block_until_ready(prepare_weight(w))

    fwd = jax.jit(msr_block_mid_trans,
                  static_argnames=("normalize", "grid_over_batch", "out_dtype"))
    out = jax.block_until_ready(fwd(x, w_mat, normalize=True))
    assert out.shape == (2, 8, 8, 32), out.shape
    assert out.dtype == jnp.bfloat16, out.dtype
    out_f32 = out.astype(jnp.float32)
    assert bool(jnp.all(jnp.isfinite(out_f32)))

    # loose tolerance: bf16 MXU inputs + bf16 output vs f32 reference
    ref = _reference(x, w, normalize=True)
    err = float(jnp.max(jnp.abs(out_f32 - ref)))
    assert err < 0.1, f"max abs err {err}"

    # also exercise the per-sample-grid path (preferred on v7x's two TCs)
    out2 = jax.block_until_ready(fwd(x, w_mat, normalize=True, grid_over_batch=True))
    err2 = float(jnp.max(jnp.abs(out2.astype(jnp.float32) - ref)))
    assert err2 < 0.1, f"max abs err (grid_over_batch) {err2}"

    print("KERNEL_OK")
</pallas_src>

<mosaic_0001>
module attributes {stable_mosaic.version = 11 : i64} {
  func.func @kernel(%arg0: i32, %arg1: memref<128x64xbf16, #tpu.memory_space<vmem>>, %arg2: memref<64x32xbf16, #tpu.memory_space<vmem>>, %arg3: memref<128x32xbf16, #tpu.memory_space<vmem>>) attributes {dimension_semantics = [#tpu.dimension_semantics<parallel>], iteration_bounds = array<i64: 1>, scalar_prefetch = 0 : i64, scratch_operands = 0 : i64, tpu.core_type = #tpu.core_type<tc>, window_params = [{transform_indices = @transform_0, window_bounds = array<i64: 128, 64>}, {pipeline_mode = #tpu.pipeline_mode<synchronous>, transform_indices = @transform_1, window_bounds = array<i64: 64, 32>}, {transform_indices = @transform_2, window_bounds = array<i64: 128, 32>}]} {
    %c0 = arith.constant 0 : index
    %c0_0 = arith.constant 0 : index
    %0 = vector.load %arg1[%c0, %c0_0] : memref<128x64xbf16, #tpu.memory_space<vmem>>, vector<128x64xbf16>
    %c0_1 = arith.constant 0 : index
    %c0_2 = arith.constant 0 : index
    %1 = vector.load %arg2[%c0_1, %c0_2] : memref<64x32xbf16, #tpu.memory_space<vmem>>, vector<64x32xbf16>
    %cst = arith.constant dense<0.000000e+00> : vector<128x32xf32>
    %2 = tpu.matmul %0, %1, %cst {dimension_numbers = #tpu.dot_dimension_numbers<[1], [0], [0], [1], [0, 0, 1, 1], [], []>} : vector<128x64xbf16>, vector<64x32xbf16>, vector<128x32xf32> -> vector<128x32xf32>
    %3 = vector.extract_strided_slice %2 {offsets = [0, 0], sizes = [64, 32], strides = [1, 1]} : vector<128x32xf32> to vector<64x32xf32>
    %cst_3 = arith.constant dense<0.000000e+00> : vector<32xf32>
    %4 = vector.multi_reduction <add>, %3, %cst_3 [0] : vector<64x32xf32> to vector<32xf32>
    %5 = vector.shape_cast %4 : vector<32xf32> to vector<1x32xf32>
    %cst_4 = arith.constant 6.400000e+01 : f32
    %6 = vector.broadcast %cst_4 : f32 to vector<1x32xf32>
    %7 = arith.divf %5, %6 : vector<1x32xf32>
    %8 = arith.mulf %3, %3 : vector<64x32xf32>
    %cst_5 = arith.constant dense<0.000000e+00> : vector<32xf32>
    %9 = vector.multi_reduction <add>, %8, %cst_5 [0] : vector<64x32xf32> to vector<32xf32>
    %10 = vector.shape_cast %9 : vector<32xf32> to vector<1x32xf32>
    %cst_6 = arith.constant 6.400000e+01 : f32
    %11 = vector.broadcast %cst_6 : f32 to vector<1x32xf32>
    %12 = arith.divf %10, %11 : vector<1x32xf32>
    %13 = arith.mulf %7, %7 : vector<1x32xf32>
    %14 = arith.subf %12, %13 : vector<1x32xf32>
    %cst_7 = arith.constant 0.000000e+00 : f32
    %15 = vector.broadcast %cst_7 : f32 to vector<1x32xf32>
    %16 = arith.maximumf %14, %15 : vector<1x32xf32>
    %17 = vector.broadcast %7 : vector<1x32xf32> to vector<64x32xf32>
    %18 = arith.subf %3, %17 : vector<64x32xf32>
    %cst_8 = arith.constant 9.99999974E-6 : f32
    %19 = vector.broadcast %cst_8 : f32 to vector<1x32xf32>
    %20 = arith.addf %16, %19 : vector<1x32xf32>
    %21 = math.rsqrt %20 : vector<1x32xf32>
    %22 = vector.broadcast %21 : vector<1x32xf32> to vector<64x32xf32>
    %23 = arith.mulf %18, %22 : vector<64x32xf32>
    %cst_9 = arith.constant 0.000000e+00 : f32
    %24 = vector.broadcast %cst_9 : f32 to vector<64x32xf32>
    %25 = arith.cmpf ogt, %23, %24 : vector<64x32xf32>
    %cst_10 = arith.constant 2.000000e-01 : f32
    %26 = vector.broadcast %cst_10 : f32 to vector<64x32xf32>
    %27 = arith.mulf %26, %23 : vector<64x32xf32>
    %28 = arith.select %25, %23, %27 : vector<64x32xi1>, vector<64x32xf32>
    %29 = arith.truncf %28 : vector<64x32xf32> to vector<64x32xbf16>
    %c0_11 = arith.constant 0 : index
    %c0_12 = arith.constant 0 : index
    %30 = vector.load %arg3[%c0_11, %c0_12] : memref<128x32xbf16, #tpu.memory_space<vmem>>, vector<64x32xbf16>
    tpu.vector_store %arg3[%c0_11, %c0_12], %29 {strides = array<i32>} : memref<128x32xbf16, #tpu.memory_space<vmem>>, vector<64x32xbf16>,
    %31 = vector.extract_strided_slice %2 {offsets = [64, 0], sizes = [64, 32], strides = [1, 1]} : vector<128x32xf32> to vector<64x32xf32>
    %cst_13 = arith.constant dense<0.000000e+00> : vector<32xf32>
    %32 = vector.multi_reduction <add>, %31, %cst_13 [0] : vector<64x32xf32> to vector<32xf32>
    %33 = vector.shape_cast %32 : vector<32xf32> to vector<1x32xf32>
    %cst_14 = arith.constant 6.400000e+01 : f32
    %34 = vector.broadcast %cst_14 : f32 to vector<1x32xf32>
    %35 = arith.divf %33, %34 : vector<1x32xf32>
    %36 = arith.mulf %31, %31 : vector<64x32xf32>
    %cst_15 = arith.constant dense<0.000000e+00> : vector<32xf32>
    %37 = vector.multi_reduction <add>, %36, %cst_15 [0] : vector<64x32xf32> to vector<32xf32>
    %38 = vector.shape_cast %37 : vector<32xf32> to vector<1x32xf32>
    %cst_16 = arith.constant 6.400000e+01 : f32
    %39 = vector.broadcast %cst_16 : f32 to vector<1x32xf32>
    %40 = arith.divf %38, %39 : vector<1x32xf32>
    %41 = arith.mulf %35, %35 : vector<1x32xf32>
    %42 = arith.subf %40, %41 : vector<1x32xf32>
    %cst_17 = arith.constant 0.000000e+00 : f32
    %43 = vector.broadcast %cst_17 : f32 to vector<1x32xf32>
    %44 = arith.maximumf %42, %43 : vector<1x32xf32>
    %45 = vector.broadcast %35 : vector<1x32xf32> to vector<64x32xf32>
    %46 = arith.subf %31, %45 : vector<64x32xf32>
    %cst_18 = arith.constant 9.99999974E-6 : f32
    %47 = vector.broadcast %cst_18 : f32 to vector<1x32xf32>
    %48 = arith.addf %44, %47 : vector<1x32xf32>
    %49 = math.rsqrt %48 : vector<1x32xf32>
    %50 = vector.broadcast %49 : vector<1x32xf32> to vector<64x32xf32>
    %51 = arith.mulf %46, %50 : vector<64x32xf32>
    %cst_19 = arith.constant 0.000000e+00 : f32
    %52 = vector.broadcast %cst_19 : f32 to vector<64x32xf32>
    %53 = arith.cmpf ogt, %51, %52 : vector<64x32xf32>
    %cst_20 = arith.constant 2.000000e-01 : f32
    %54 = vector.broadcast %cst_20 : f32 to vector<64x32xf32>
    %55 = arith.mulf %54, %51 : vector<64x32xf32>
    %56 = arith.select %53, %51, %55 : vector<64x32xi1>, vector<64x32xf32>
    %57 = arith.truncf %56 : vector<64x32xf32> to vector<64x32xbf16>
    %c64 = arith.constant 64 : index
    %c0_21 = arith.constant 0 : index
    %58 = vector.load %arg3[%c64, %c0_21] : memref<128x32xbf16, #tpu.memory_space<vmem>>, vector<64x32xbf16>
    tpu.vector_store %arg3[%c64, %c0_21], %57 {strides = array<i32>} : memref<128x32xbf16, #tpu.memory_space<vmem>>, vector<64x32xbf16>,
    return
  }
  func.func @transform_0(%arg0: i32) -> (i32, i32) {
    %c0_i32 = arith.constant 0 : i32
    %c0_i32_0 = arith.constant 0 : i32
    return %arg0, %c0_i32 : i32, i32
  }
  func.func @transform_1(%arg0: i32) -> (i32, i32) {
    %c0_i32 = arith.constant 0 : i32
    %c0_i32_0 = arith.constant 0 : i32
    %c0_i32_1 = arith.constant 0 : i32
    return %c0_i32, %c0_i32_0 : i32, i32
  }
  func.func @transform_2(%arg0: i32) -> (i32, i32) {
    %c0_i32 = arith.constant 0 : i32
    %c0_i32_0 = arith.constant 0 : i32
    return %arg0, %c0_i32 : i32, i32
  }
}

</mosaic_0001>

<llo_original>
// kernel: msr_block_mid_trans.1
$region0: #{msr_block_mid_trans.1}
  #allocation0 [shape = 'u32[]', space=smem, size = 0x4, offset = 0x4, fixed_abs, tag = 'smem constant byte address 0x4 - core index']
  #allocation1 [shape = 'u32[72,128]{1,0:T(1,128)}', space=vmem, size = 0x9000, scoped, tag = 'internal scratch']
  %s0 = inlined_call_operand.vmem [shape: bf16[128,64], index: 0, kind: input, shape index: {}]
  %s1 = inlined_call_operand.vmem [shape: bf16[64,32], index: 1, kind: input, shape index: {}]
  %s2 = inlined_call_operand.hbm [shape: bf16[128,32], index: 2, kind: output, shape index: {}]
  %s3 = sld [smem:[#allocation0]]
  $region18: #{msr_block_mid_trans.1} parent=0
    _
  %s5 = ssub.s32 1, %s3
  %s6 = scalar_select 0, %s5, %s3
  $region1: #{msr_block_mid_trans.1} parent=0
    #allocation2 [shape = 'u8[32768]{0}', space=vmem, size = 0x8000, scoped, tag = 'output window, operand 0, single buffered']
    #allocation3 [shape = 's32[1]{0}', space=sflag, size = 0x4, scoped, tag = 'scoped memory for msr_block_mid_trans.1']
    %7 = vsyncpa [#allocation3], 0
    // Predicated region
    $region2: #{msr_block_mid_trans.1} parent=1 // pred_check
      _
    $region3: #{msr_block_mid_trans.1} parent=1 // pred_check_branch
      %9 = sbr.rel (0) target = $region5
    $region4: #{msr_block_mid_trans.1} parent=1 // pred_region
      _
    $region5: #{msr_block_mid_trans.1} parent=1 // pred_fallthru
      _
    // Predicated region
    $region6: #{msr_block_mid_trans.1} parent=1 // pred_check
      _
    $region7: #{msr_block_mid_trans.1} parent=1 // pred_check_branch
      %11 = sbr.rel (0) target = $region9
    $region8: #{msr_block_mid_trans.1} parent=1 // pred_region
      _
    $region9: #{msr_block_mid_trans.1} parent=1 // pred_fallthru
      _
    %v13 = vld [vmem:[%s0] sm:$0xf]
    %v14 = vld [vmem:[%s0 + $0x4] sm:$0xf]
    %v15 = vld [vmem:[%s0 + $0x8] sm:$0xf]
    %v16 = vld [vmem:[%s0 + $0xc] sm:$0xf]
    %v17 = vld [vmem:[%s0 + $0x10] sm:$0xf]
    %v18 = vld [vmem:[%s0 + $0x14] sm:$0xf]
    %v19 = vld [vmem:[%s0 + $0x18] sm:$0xf]
    %v20 = vld [vmem:[%s0 + $0x1c] sm:$0xf]
    %v21 = vld [vmem:[%s0 + $0x20] sm:$0xf]
    %v22 = vld [vmem:[%s0 + $0x24] sm:$0xf]
    %v23 = vld [vmem:[%s0 + $0x28] sm:$0xf]
    %v24 = vld [vmem:[%s0 + $0x2c] sm:$0xf]
    %v25 = vld [vmem:[%s0 + $0x30] sm:$0xf]
    %v26 = vld [vmem:[%s0 + $0x34] sm:$0xf]
    %v27 = vld [vmem:[%s0 + $0x38] sm:$0xf]
    %v28 = vld [vmem:[%s0 + $0x3c] sm:$0xf]
    %v29 = vld [vmem:[%s1] sm:$0xf]
    %v30 = vld [vmem:[%s1 + $0x4] sm:$0xf]
    %v31 = vld [vmem:[%s1 + $0x8] sm:$0xf]
    %v32 = vld [vmem:[%s1 + $0xc] sm:$0xf]
    %v33 = vld [vmem:[%s1 + $0x10] sm:$0xf]
    %v34 = vld [vmem:[%s1 + $0x14] sm:$0xf]
    %v35 = vld [vmem:[%s1 + $0x18] sm:$0xf]
    %v36 = vld [vmem:[%s1 + $0x1c] sm:$0xf]
    %v53 = vunpack.c.l.b16 %v13
    %v54 = vunpack.c.l.b16 %v14
    %v55 = vunpack.c.l.b16 %v15
    %v56 = vunpack.c.l.b16 %v16
    %v57 = vunpack.c.l.b16 %v17
    %v58 = vunpack.c.l.b16 %v18
    %v59 = vunpack.c.l.b16 %v19
    %v60 = vunpack.c.l.b16 %v20
    %v61 = vunpack.c.l.b16 %v21
    %v62 = vunpack.c.l.b16 %v22
    %v63 = vunpack.c.l.b16 %v23
    %v64 = vunpack.c.l.b16 %v24
    %v65 = vunpack.c.l.b16 %v25
    %v66 = vunpack.c.l.b16 %v26
    %v67 = vunpack.c.l.b16 %v27
    %v68 = vunpack.c.l.b16 %v28
    %v69 = vpack.c.b16 %v54, %v53
    %v70 = vpack.c.b16 %v56, %v55
    %v71 = vpack.c.b16 %v58, %v57
    %v72 = vpack.c.b16 %v60, %v59
    %v73 = vpack.c.b16 %v62, %v61
    %v74 = vpack.c.b16 %v64, %v63
    %v75 = vpack.c.b16 %v66, %v65
    %v76 = vpack.c.b16 %v68, %v67
    %v85 = vunpack.c.l.b16 %v29
    %v86 = vunpack.c.l.b16 %v30
    %v87 = vunpack.c.l.b16 %v31
    %v88 = vunpack.c.l.b16 %v32
    %v89 = vunpack.c.l.b16 %v33
    %v90 = vunpack.c.l.b16 %v34
    %v91 = vunpack.c.l.b16 %v35
    %v92 = vunpack.c.l.b16 %v36
    %v93 = vpack.c.b16 %v86, %v85
    %v94 = vpack.c.b16 %v88, %v87
    %v95 = vpack.c.b16 %v90, %v89
    %v96 = vpack.c.b16 %v92, %v91
    %vm101 = vcmask 523264
    %v103 = vsel %vm101, %v69, 0
    %v106 = vsel %vm101, %v70, 0
    %v109 = vsel %vm101, %v71, 0
    %v112 = vsel %vm101, %v72, 0
    %v115 = vsel %vm101, %v73, 0
    %v118 = vsel %vm101, %v74, 0
    %v121 = vsel %vm101, %v75, 0
    %v124 = vsel %vm101, %v76, 0
    %126 = vmatpush.bf16.msra.mxu0 0
    %127 = vmatpush.bf16.msra.mxu0 0
    %128 = vmatpush.bf16.msra.mxu0 0
    %129 = vmatpush.bf16.msra.mxu0 0
    %130 = vmatpush.bf16.msra.mxu0 %v96
    %131 = vmatpush.bf16.msra.mxu0 %v95
    %132 = vmatpush.bf16.msra.mxu0 %v94
    %133 = vmatpush.bf16.msra.mxu0 %v93
    %134 = vmatmul.bf16.gmra.mxu0 %v103
    %v135 = vpop.f32.mrf.mxu0
    %v136 = vadd.f32 0.0, %v135
    %v137 = vpop.f32.mrf.mxu0
    %v138 = vadd.f32 0.0, %v137
    %139 = vmatmul.bf16.gmra.mxu0 %v106
    %v140 = vpop.f32.mrf.mxu0
    %v141 = vadd.f32 0.0, %v140
    %v142 = vpop.f32.mrf.mxu0
    %v143 = vadd.f32 0.0, %v142
    %144 = vmatmul.bf16.gmra.mxu0 %v109
    %v145 = vpop.f32.mrf.mxu0
    %v146 = vadd.f32 0.0, %v145
    %v147 = vpop.f32.mrf.mxu0
    %v148 = vadd.f32 0.0, %v147
    %149 = vmatmul.bf16.gmra.mxu0 %v112
    %v150 = vpop.f32.mrf.mxu0
    %v151 = vadd.f32 0.0, %v150
    %v152 = vpop.f32.mrf.mxu0
    %v153 = vadd.f32 0.0, %v152
    %154 = vmatmul.bf16.gmra.mxu0 %v115
    %v155 = vpop.f32.mrf.mxu0
    %v156 = vadd.f32 0.0, %v155
    %v157 = vpop.f32.mrf.mxu0
    %v158 = vadd.f32 0.0, %v157
    %159 = vmatmul.bf16.gmra.mxu0 %v118
    %v160 = vpop.f32.mrf.mxu0
    %v161 = vadd.f32 0.0, %v160
    %v162 = vpop.f32.mrf.mxu0
    %v163 = vadd.f32 0.0, %v162
    %164 = vmatmul.bf16.gmra.mxu0 %v121
    %v165 = vpop.f32.mrf.mxu0
    %v166 = vadd.f32 0.0, %v165
    %v167 = vpop.f32.mrf.mxu0
    %v168 = vadd.f32 0.0, %v167
    %169 = vmatmul.bf16.gmra.mxu0 %v124
    %v170 = vpop.f32.mrf.mxu0
    %v171 = vadd.f32 0.0, %v170
    %v172 = vpop.f32.mrf.mxu0
    %v173 = vadd.f32 0.0, %v172
    %174 = vdwg.mxu0
    %vm175 = vcmask 261120
    %v176 = vsel %vm175, %v136, 0.0
    %v177 = vsel %vm175, %v138, 0.0
    %v178 = vadd.f32 %v176, %v177
    %v179 = vsel %vm175, %v141, 0.0
    %v180 = vadd.f32 %v178, %v179
    %v181 = vsel %vm175, %v143, 0.0
    %v182 = vadd.f32 %v180, %v181
    %v183 = vsel %vm175, %v146, 0.0
    %v184 = vadd.f32 %v182, %v183
    %v185 = vsel %vm175, %v148, 0.0
    %v186 = vadd.f32 %v184, %v185
    %v187 = vsel %vm175, %v151, 0.0
    %v188 = vadd.f32 %v186, %v187
    %v189 = vsel %vm175, %v153, 0.0
    %v190 = vadd.f32 %v188, %v189
    %v191 = vrot.slane %v190, 4
    %v192 = vadd.f32 %v190, %v191
    %v193 = vrot.slane %v192, 2
    %v194 = vadd.f32 %v192, %v193
    %v195 = vrot.slane %v194, 1
    %v196 = vadd.f32 %v194, %v195
    %v197 = vrcp.pop 64.0
    %v198 = vmul.f32 64.0, %v197
    %v199 = vsub.f32 1.0, %v198
    %v200 = vmul.f32 %v197, %v199
    %v201 = vadd.f32 %v197, %v200
    %vm202 = vweird.f32 %v197
    %v203 = vsel %vm202, %v197, %v201
    %v204 = vmul.f32 %v196, %v203
    %v205 = vmul.f32 %v136, %v136
    %v206 = vmul.f32 %v138, %v138
    %v207 = vmul.f32 %v141, %v141
    %v208 = vmul.f32 %v143, %v143
    %v209 = vmul.f32 %v146, %v146
    %v210 = vmul.f32 %v148, %v148
    %v211 = vmul.f32 %v151, %v151
    %v212 = vmul.f32 %v153, %v153
    %v213 = vsel %vm175, %v205, 0.0
    %v214 = vsel %vm175, %v206, 0.0
    %v215 = vadd.f32 %v213, %v214
    %v216 = vsel %vm175, %v207, 0.0
    %v217 = vadd.f32 %v215, %v216
    %v218 = vsel %vm175, %v208, 0.0
    %v219 = vadd.f32 %v217, %v218
    %v220 = vsel %vm175, %v209, 0.0
    %v221 = vadd.f32 %v219, %v220
    %v222 = vsel %vm175, %v210, 0.0
    %v223 = vadd.f32 %v221, %v222
    %v224 = vsel %vm175, %v211, 0.0
    %v225 = vadd.f32 %v223, %v224
    %v226 = vsel %vm175, %v212, 0.0
    %v227 = vadd.f32 %v225, %v226
    %v228 = vrot.slane %v227, 4
    %v229 = vadd.f32 %v227, %v228
    %v230 = vrot.slane %v229, 2
    %v231 = vadd.f32 %v229, %v230
    %v232 = vrot.slane %v231, 1
    %v233 = vadd.f32 %v231, %v232
    %v234 = vmul.f32 %v233, %v203
    %v235 = vmul.f32 %v204, %v204
    %v236 = vsub.f32 %v234, %v235
    %v237 = vmax.f32 %v236, 0.0
    %v238 = vsub.f32 %v136, %v204
    %v239 = vsub.f32 %v138, %v204
    %v240 = vsub.f32 %v141, %v204
    %v241 = vsub.f32 %v143, %v204
    %v242 = vsub.f32 %v146, %v204
    %v243 = vsub.f32 %v148, %v204
    %v244 = vsub.f32 %v151, %v204
    %v245 = vsub.f32 %v153, %v204
    %v246 = vadd.f32 %v237, 1e-05
    %v247 = vrsqrt.pop %v246
    %v248 = vmul.f32 %v247, %v246
    %v249 = vmul.f32 %v248, %v247
    %v250 = vmul.f32 0.5, %v249
    %v251 = vsub.f32 1.5, %v250
    %v252 = vmul.f32 %v247, %v251
    %vm253 = vweird.f32 %v246
    %vm254 = vweird.f32 %v247
    %vm255 = vmor %vm253, %vm254
    %v256 = vsel %vm255, %v247, %v252
    %v257 = vmul.f32 %v238, %v256
    %v258 = vmul.f32 %v239, %v256
    %v259 = vmul.f32 %v240, %v256
    %v260 = vmul.f32 %v241, %v256
    %v261 = vmul.f32 %v242, %v256
    %v262 = vmul.f32 %v243, %v256
    %v263 = vmul.f32 %v244, %v256
    %v264 = vmul.f32 %v245, %v256
    %vm265 = vcmp.gt.f32.partialorder %v257, 0.0
    %vm266 = vcmp.gt.f32.partialorder %v258, 0.0
    %vm267 = vcmp.gt.f32.partialorder %v259, 0.0
    %vm268 = vcmp.gt.f32.partialorder %v260, 0.0
    %vm269 = vcmp.gt.f32.partialorder %v261, 0.0
    %vm270 = vcmp.gt.f32.partialorder %v262, 0.0
    %vm271 = vcmp.gt.f32.partialorder %v263, 0.0
    %vm272 = vcmp.gt.f32.partialorder %v264, 0.0
    %v273 = vmul.f32 %v257, 0.2
    %v274 = vmul.f32 %v258, 0.2
    %v275 = vmul.f32 %v259, 0.2
    %v276 = vmul.f32 %v260, 0.2
    %v277 = vmul.f32 %v261, 0.2
    %v278 = vmul.f32 %v262, 0.2
    %v279 = vmul.f32 %v263, 0.2
    %v280 = vmul.f32 %v264, 0.2
    %v281 = vsel %vm265, %v257, %v273
    %v282 = vsel %vm266, %v258, %v274
    %v283 = vsel %vm267, %v259, %v275
    %v284 = vsel %vm268, %v260, %v276
    %v285 = vsel %vm269, %v261, %v277
    %v286 = vsel %vm270, %v262, %v278
    %v287 = vsel %vm271, %v263, %v279
    %v288 = vsel %vm272, %v264, %v280
    %v289 = vpack.c.bf16 %v281, %v281
    %v290 = vpack.c.bf16 %v282, %v282
    %v291 = vpack.c.bf16 %v283, %v283
    %v292 = vpack.c.bf16 %v284, %v284
    %v293 = vpack.c.bf16 %v285, %v285
    %v294 = vpack.c.bf16 %v286, %v286
    %v295 = vpack.c.bf16 %v287, %v287
    %v296 = vpack.c.bf16 %v288, %v288
    %vm297 = vcmask 257024
    %298 = vst.msk [vmem:[#allocation2] sm:$0xf] %vm297, %v289
    %299 = vst.msk [vmem:[#allocation2 + $0x4] sm:$0xf] %vm297, %v290
    %300 = vst.msk [vmem:[#allocation2 + $0x8] sm:$0xf] %vm297, %v291
    %301 = vst.msk [vmem:[#allocation2 + $0xc] sm:$0xf] %vm297, %v292
    %302 = vst.msk [vmem:[#allocation2 + $0x10] sm:$0xf] %vm297, %v293
    %303 = vst.msk [vmem:[#allocation2 + $0x14] sm:$0xf] %vm297, %v294
    %304 = vst.msk [vmem:[#allocation2 + $0x18] sm:$0xf] %vm297, %v295
    %305 = vst.msk [vmem:[#allocation2 + $0x1c] sm:$0xf] %vm297, %v296
    %v306 = vsel %vm175, %v156, 0.0
    %v307 = vsel %vm175, %v158, 0.0
    %v308 = vadd.f32 %v306, %v307
    %v309 = vsel %vm175, %v161, 0.0
    %v310 = vadd.f32 %v308, %v309
    %v311 = vsel %vm175, %v163, 0.0
    %v312 = vadd.f32 %v310, %v311
    %v313 = vsel %vm175, %v166, 0.0
    %v314 = vadd.f32 %v312, %v313
    %v315 = vsel %vm175, %v168, 0.0
    %v316 = vadd.f32 %v314, %v315
    %v317 = vsel %vm175, %v171, 0.0
    %v318 = vadd.f32 %v316, %v317
    %v319 = vsel %vm175, %v173, 0.0
    %v320 = vadd.f32 %v318, %v319
    %v321 = vrot.slane %v320, 4
    %v322 = vadd.f32 %v320, %v321
    %v323 = vrot.slane %v322, 2
    %v324 = vadd.f32 %v322, %v323
    %v325 = vrot.slane %v324, 1
    %v326 = vadd.f32 %v324, %v325
    %v327 = vmul.f32 %v326, %v203
    %v328 = vmul.f32 %v156, %v156
    %v329 = vmul.f32 %v158, %v158
    %v330 = vmul.f32 %v161, %v161
    %v331 = vmul.f32 %v163, %v163
    %v332 = vmul.f32 %v166, %v166
    %v333 = vmul.f32 %v168, %v168
    %v334 = vmul.f32 %v171, %v171
    %v335 = vmul.f32 %v173, %v173
    %v336 = vsel %vm175, %v328, 0.0
    %v337 = vsel %vm175, %v329, 0.0
    %v338 = vadd.f32 %v336, %v337
    %v339 = vsel %vm175, %v330, 0.0
    %v340 = vadd.f32 %v338, %v339
    %v341 = vsel %vm175, %v331, 0.0
    %v342 = vadd.f32 %v340, %v341
    %v343 = vsel %vm175, %v332, 0.0
    %v344 = vadd.f32 %v342, %v343
    %v345 = vsel %vm175, %v333, 0.0
    %v346 = vadd.f32 %v344, %v345
    %v347 = vsel %vm175, %v334, 0.0
    %v348 = vadd.f32 %v346, %v347
    %v349 = vsel %vm175, %v335, 0.0
    %v350 = vadd.f32 %v348, %v349
    %v351 = vrot.slane %v350, 4
    %v352 = vadd.f32 %v350, %v351
    %v353 = vrot.slane %v352, 2
    %v354 = vadd.f32 %v352, %v353
    %v355 = vrot.slane %v354, 1
    %v356 = vadd.f32 %v354, %v355
    %v357 = vmul.f32 %v356, %v203
    %v358 = vmul.f32 %v327, %v327
    %v359 = vsub.f32 %v357, %v358
    %v360 = vmax.f32 %v359, 0.0
    %v361 = vsub.f32 %v156, %v327
    %v362 = vsub.f32 %v158, %v327
    %v363 = vsub.f32 %v161, %v327
    %v364 = vsub.f32 %v163, %v327
    %v365 = vsub.f32 %v166, %v327
    %v366 = vsub.f32 %v168, %v327
    %v367 = vsub.f32 %v171, %v327
    %v368 = vsub.f32 %v173, %v327
    %v369 = vadd.f32 %v360, 1e-05
    %v370 = vrsqrt.pop %v369
    %v371 = vmul.f32 %v370, %v369
    %v372 = vmul.f32 %v371, %v370
    %v373 = vmul.f32 0.5, %v372
    %v374 = vsub.f32 1.5, %v373
    %v375 = vmul.f32 %v370, %v374
    %vm376 = vweird.f32 %v369
    %vm377 = vweird.f32 %v370
    %vm378 = vmor %vm376, %vm377
    %v379 = vsel %vm378, %v370, %v375
    %v380 = vmul.f32 %v361, %v379
    %v381 = vmul.f32 %v362, %v379
    %v382 = vmul.f32 %v363, %v379
    %v383 = vmul.f32 %v364, %v379
    %v384 = vmul.f32 %v365, %v379
    %v385 = vmul.f32 %v366, %v379
    %v386 = vmul.f32 %v367, %v379
    %v387 = vmul.f32 %v368, %v379
    %vm388 = vcmp.gt.f32.partialorder %v380, 0.0
    %vm389 = vcmp.gt.f32.partialorder %v381, 0.0
    %vm390 = vcmp.gt.f32.partialorder %v382, 0.0
    %vm391 = vcmp.gt.f32.partialorder %v383, 0.0
    %vm392 = vcmp.gt.f32.partialorder %v384, 0.0
    %vm393 = vcmp.gt.f32.partialorder %v385, 0.0
    %vm394 = vcmp.gt.f32.partialorder %v386, 0.0
    %vm395 = vcmp.gt.f32.partialorder %v387, 0.0
    %v396 = vmul.f32 %v380, 0.2
    %v397 = vmul.f32 %v381, 0.2
    %v398 = vmul.f32 %v382, 0.2
    %v399 = vmul.f32 %v383, 0.2
    %v400 = vmul.f32 %v384, 0.2
    %v401 = vmul.f32 %v385, 0.2
    %v402 = vmul.f32 %v386, 0.2
    %v403 = vmul.f32 %v387, 0.2
    %v404 = vsel %vm388, %v380, %v396
    %v405 = vsel %vm389, %v381, %v397
    %v406 = vsel %vm390, %v382, %v398
    %v407 = vsel %vm391, %v383, %v399
    %v408 = vsel %vm392, %v384, %v400
    %v409 = vsel %vm393, %v385, %v401
    %v410 = vsel %vm394, %v386, %v402
    %v411 = vsel %vm395, %v387, %v403
    %v412 = vpack.c.bf16 %v404, %v404
    %v413 = vpack.c.bf16 %v405, %v405
    %v414 = vpack.c.bf16 %v406, %v406
    %v415 = vpack.c.bf16 %v407, %v407
    %v416 = vpack.c.bf16 %v408, %v408
    %v417 = vpack.c.bf16 %v409, %v409
    %v418 = vpack.c.bf16 %v410, %v410
    %v419 = vpack.c.bf16 %v411, %v411
    %420 = vst.msk [vmem:[#allocation2 + $0x20] sm:$0xf] %vm297, %v412
    %421 = vst.msk [vmem:[#allocation2 + $0x24] sm:$0xf] %vm297, %v413
    %422 = vst.msk [vmem:[#allocation2 + $0x28] sm:$0xf] %vm297, %v414
    %423 = vst.msk [vmem:[#allocation2 + $0x2c] sm:$0xf] %vm297, %v415
    %424 = vst.msk [vmem:[#allocation2 + $0x30] sm:$0xf] %vm297, %v416
    %425 = vst.msk [vmem:[#allocation2 + $0x34] sm:$0xf] %vm297, %v417
    %426 = vst.msk [vmem:[#allocation2 + $0x38] sm:$0xf] %vm297, %v418
    %427 = vst.msk [vmem:[#allocation2 + $0x3c] sm:$0xf] %vm297, %v419
    // Predicated region
    $region10: #{msr_block_mid_trans.1} parent=1 // pred_check
      _
    $region11: #{msr_block_mid_trans.1} parent=1 // pred_check_branch
      %429 = sbr.rel (0) target = $region13
    $region12: #{msr_block_mid_trans.1} parent=1 // pred_region
      %431 = vsyncadd [#allocation3], 0
      %s432 = sshll.u32 [#allocation2], 4
      %s433 = int_to_ptr.vmem [resolvable:$true] %s432
      %s434 = sshll.u32 %s2, 4
      %s435 = int_to_ptr.hbm [resolvable:$true] %s434
      %440 = dma.vmem_to_hbm [thread:$0]  %s433, 1024, %s435, [#allocation3], 64, 64, 4
    $region13: #{msr_block_mid_trans.1} parent=1 // pred_fallthru
      _
    // Predicated region
    $region14: #{msr_block_mid_trans.1} parent=1 // pred_check
      _
    $region15: #{msr_block_mid_trans.1} parent=1 // pred_check_branch
      %442 = sbr.rel (0) target = $region17
    $region16: #{msr_block_mid_trans.1} parent=1 // pred_region
      %444 = dma.done [#allocation3], 1024
    $region17: #{msr_block_mid_trans.1} parent=1 // pred_fallthru
      _
    %445 = vsyncpa [#allocation3], 1

</llo_original>
